<compile_context>
chip_gen: v6e
topology: v6e:2x2x1
jax: 0.10.0
libtpu: 0.0.40
codegen_flags: <defaults>
</compile_context>

<pallas_src>
import functools

import jax
import jax.numpy as jnp
from jax.experimental import pallas as pl
from jax.experimental.pallas import tpu as pltpu

DROPOUT_P = 0.2


def encoder_kernel(x_ref, m1_ref, m2_ref, eps_ref,
                   w1_ref, b1_ref, w2_ref, b2_ref, wh_ref, bh_ref,
                   out_ref, *, latent_dim):
    """One batch tile: fc1 -> fc2 -> fused heads -> reparameterization."""
    # fc1: Linear (bf16 MXU, f32 accumulate) -> ReLU -> Dropout (pre-scaled mask)
    h = jnp.dot(x_ref[...].astype(jnp.bfloat16), w1_ref[...],
                preferred_element_type=jnp.float32) + b1_ref[...]
    h = jnp.maximum(h, 0.0) * m1_ref[...]

    # fc2: Linear -> ReLU -> Dropout
    h = jnp.dot(h.astype(jnp.bfloat16), w2_ref[...],
                preferred_element_type=jnp.float32) + b2_ref[...]
    h = jnp.maximum(h, 0.0) * m2_ref[...]

    # Fused heads: single (hidden, 2*latent) matmul, ReLU on both halves
    # (the PyTorch module applies ReLU to mu and logvar).
    heads = jnp.dot(h.astype(jnp.bfloat16), wh_ref[...],
                    preferred_element_type=jnp.float32) + bh_ref[...]
    heads = jnp.maximum(heads, 0.0)
    mean = heads[:, :latent_dim]
    logvar = heads[:, latent_dim:]

    # Reparameterization: z = mean + eps * exp(logvar / 2)
    z = mean + eps_ref[...] * jnp.exp(logvar * 0.5)

    # Single stacked store: [z | mean | logvar]
    out_ref[...] = jnp.concatenate([z, mean, logvar], axis=-1)


def encoder_forward(params, x, key, *, dropout_p=DROPOUT_P, tile_b=512,
                    training=True):
    B, D_in = x.shape
    H = params["w1"].shape[1]
    L = params["wmu"].shape[1]

    # Batch tiling: round up to sublane multiple, then to a multiple of tile_b.
    b8 = -(-B // 8) * 8
    tile_b = min(tile_b, b8)
    b_pad = -(-b8 // tile_b) * tile_b
    grid = (pl.cdiv(b_pad, tile_b),)

    x_pad = jnp.pad(x, ((0, b_pad - B), (0, 0)))

    # Randomness drawn once, outside the kernel (matches module semantics;
    # not bit-identical to torch's RNG).
    k1, k2, k3 = jax.random.split(key, 3)
    if training and dropout_p > 0.0:
        scale = 1.0 / (1.0 - dropout_p)
        m1 = jax.random.bernoulli(k1, 1.0 - dropout_p, (b_pad, H)).astype(jnp.float32) * scale
        m2 = jax.random.bernoulli(k2, 1.0 - dropout_p, (b_pad, H)).astype(jnp.float32) * scale
    else:
        m1 = jnp.ones((b_pad, H), jnp.float32)
        m2 = jnp.ones((b_pad, H), jnp.float32)
    eps = jax.random.normal(k3, (b_pad, L), jnp.float32)

    # bf16 weights for the MXU; biases stay f32 (epilogue is f32 everywhere).
    w1 = params["w1"].astype(jnp.bfloat16)
    w2 = params["w2"].astype(jnp.bfloat16)
    wh = jnp.concatenate([params["wmu"], params["wlv"]], axis=1).astype(jnp.bfloat16)
    b1 = params["b1"]
    b2 = params["b2"]
    bh = jnp.concatenate([params["bmu"], params["blv"]], axis=1)

    def row_spec(d):      # batch-tiled activations / outputs
        return pl.BlockSpec((tile_b, d), lambda i: (i, 0))

    def full_spec(shape):  # weights / biases: same block every step -> VMEM-resident
        return pl.BlockSpec(shape, lambda i: (0, 0))

    out = pl.pallas_call(
        functools.partial(encoder_kernel, latent_dim=L),
        out_shape=jax.ShapeDtypeStruct((b_pad, 3 * L), jnp.float32),
        grid=grid,
        in_specs=[
            row_spec(D_in),          # x
            row_spec(H),             # dropout mask 1 (pre-scaled)
            row_spec(H),             # dropout mask 2 (pre-scaled)
            row_spec(L),             # eps
            full_spec((D_in, H)),    # w1 (bf16)
            full_spec((1, H)),       # b1
            full_spec((H, H)),       # w2 (bf16)
            full_spec((1, H)),       # b2
            full_spec((H, 2 * L)),   # fused head weights (bf16)
            full_spec((1, 2 * L)),   # fused head bias
        ],
        out_specs=row_spec(3 * L),
        compiler_params=pltpu.CompilerParams(
            dimension_semantics=("parallel",),       # shard batch across TCs on v7x
            vmem_limit_bytes=48 * 1024 * 1024,       # explicit budget; fits v7x's 64 MiB
        ),
    )(x_pad, m1, m2, eps, w1, b1, w2, b2, wh, bh)

    z = out[:B, :L]
    mean = out[:B, L:2 * L]
    logvar = out[:B, 2 * L:]
    return z, mean, logvar


def init_params(key, input_dim, hidden_dim, latent_dim):
    """Deterministic init mimicking nn.Linear's default U(-1/sqrt(fan_in), +)."""
    def linear(k, fan_in, fan_out):
        kw, kb = jax.random.split(k)
        bound = 1.0 / float(jnp.sqrt(fan_in))
        w = jax.random.uniform(kw, (fan_in, fan_out), jnp.float32, -bound, bound)
        b = jax.random.uniform(kb, (1, fan_out), jnp.float32, -bound, bound)
        return w, b

    k1, k2, k3, k4 = jax.random.split(key, 4)
    w1, b1 = linear(k1, input_dim, hidden_dim)
    w2, b2 = linear(k2, hidden_dim, hidden_dim)
    wmu, bmu = linear(k3, hidden_dim, latent_dim)
    wlv, blv = linear(k4, hidden_dim, latent_dim)
    return dict(w1=w1, b1=b1, w2=w2, b2=b2,
                wmu=wmu, bmu=bmu, wlv=wlv, blv=blv)


if __name__ == "__main__":
    key = jax.random.PRNGKey(0)
    kx, kp, kn = jax.random.split(key, 3)

    B, input_dim, hidden_dim, latent_dim = 8, 32, 32, 16
    x = jax.random.normal(kx, (B, input_dim), jnp.float32)
    params = init_params(kp, input_dim, hidden_dim, latent_dim)

    z, mean, logvar = encoder_forward(params, x, kn)
    jax.block_until_ready((z, mean, logvar))

    assert z.shape == (B, latent_dim)
    assert mean.shape == (B, latent_dim)
    assert logvar.shape == (B, latent_dim)
    assert bool(jnp.all(mean >= 0.0)) and bool(jnp.all(logvar >= 0.0))
    assert bool(jnp.all(jnp.isfinite(z)))
    print("KERNEL_OK")
</pallas_src>

<mosaic_0001>
module attributes {stable_mosaic.version = 11 : i64} {
  func.func @encoder_kernel(%arg0: i32, %arg1: memref<8x32xf32, #tpu.memory_space<vmem>>, %arg2: memref<8x32xf32, #tpu.memory_space<vmem>>, %arg3: memref<8x32xf32, #tpu.memory_space<vmem>>, %arg4: memref<8x16xf32, #tpu.memory_space<vmem>>, %arg5: memref<32x32xbf16, #tpu.memory_space<vmem>>, %arg6: memref<1x32xf32, #tpu.memory_space<vmem>>, %arg7: memref<32x32xbf16, #tpu.memory_space<vmem>>, %arg8: memref<1x32xf32, #tpu.memory_space<vmem>>, %arg9: memref<32x32xbf16, #tpu.memory_space<vmem>>, %arg10: memref<1x32xf32, #tpu.memory_space<vmem>>, %arg11: memref<8x48xf32, #tpu.memory_space<vmem>>) attributes {dimension_semantics = [#tpu.dimension_semantics<parallel>], iteration_bounds = array<i64: 1>, scalar_prefetch = 0 : i64, scratch_operands = 0 : i64, tpu.core_type = #tpu.core_type<tc>, window_params = [{transform_indices = @transform_0, window_bounds = array<i64: 8, 32>}, {transform_indices = @transform_1, window_bounds = array<i64: 8, 32>}, {transform_indices = @transform_2, window_bounds = array<i64: 8, 32>}, {transform_indices = @transform_3, window_bounds = array<i64: 8, 16>}, {pipeline_mode = #tpu.pipeline_mode<synchronous>, transform_indices = @transform_4, window_bounds = array<i64: 32, 32>}, {pipeline_mode = #tpu.pipeline_mode<synchronous>, transform_indices = @transform_5, window_bounds = array<i64: 1, 32>}, {pipeline_mode = #tpu.pipeline_mode<synchronous>, transform_indices = @transform_6, window_bounds = array<i64: 32, 32>}, {pipeline_mode = #tpu.pipeline_mode<synchronous>, transform_indices = @transform_7, window_bounds = array<i64: 1, 32>}, {pipeline_mode = #tpu.pipeline_mode<synchronous>, transform_indices = @transform_8, window_bounds = array<i64: 32, 32>}, {pipeline_mode = #tpu.pipeline_mode<synchronous>, transform_indices = @transform_9, window_bounds = array<i64: 1, 32>}, {transform_indices = @transform_10, window_bounds = array<i64: 8, 48>}]} {
    %c0 = arith.constant 0 : index
    %c0_0 = arith.constant 0 : index
    %0 = vector.load %arg1[%c0, %c0_0] : memref<8x32xf32, #tpu.memory_space<vmem>>, vector<8x32xf32>
    %1 = arith.truncf %0 : vector<8x32xf32> to vector<8x32xbf16>
    %c0_1 = arith.constant 0 : index
    %c0_2 = arith.constant 0 : index
    %2 = vector.load %arg5[%c0_1, %c0_2] : memref<32x32xbf16, #tpu.memory_space<vmem>>, vector<32x32xbf16>
    %cst = arith.constant dense<0.000000e+00> : vector<8x32xf32>
    %3 = tpu.matmul %1, %2, %cst {dimension_numbers = #tpu.dot_dimension_numbers<[1], [0], [0], [1], [0, 0, 1, 1], [], []>} : vector<8x32xbf16>, vector<32x32xbf16>, vector<8x32xf32> -> vector<8x32xf32>
    %c0_3 = arith.constant 0 : index
    %c0_4 = arith.constant 0 : index
    %4 = vector.load %arg6[%c0_3, %c0_4] : memref<1x32xf32, #tpu.memory_space<vmem>>, vector<1x32xf32>
    %5 = vector.broadcast %4 : vector<1x32xf32> to vector<8x32xf32>
    %6 = arith.addf %3, %5 : vector<8x32xf32>
    %cst_5 = arith.constant 0.000000e+00 : f32
    %7 = vector.broadcast %cst_5 : f32 to vector<8x32xf32>
    %8 = arith.maximumf %6, %7 : vector<8x32xf32>
    %c0_6 = arith.constant 0 : index
    %c0_7 = arith.constant 0 : index
    %9 = vector.load %arg2[%c0_6, %c0_7] : memref<8x32xf32, #tpu.memory_space<vmem>>, vector<8x32xf32>
    %10 = arith.mulf %8, %9 : vector<8x32xf32>
    %11 = arith.truncf %10 : vector<8x32xf32> to vector<8x32xbf16>
    %c0_8 = arith.constant 0 : index
    %c0_9 = arith.constant 0 : index
    %12 = vector.load %arg7[%c0_8, %c0_9] : memref<32x32xbf16, #tpu.memory_space<vmem>>, vector<32x32xbf16>
    %cst_10 = arith.constant dense<0.000000e+00> : vector<8x32xf32>
    %13 = tpu.matmul %11, %12, %cst_10 {dimension_numbers = #tpu.dot_dimension_numbers<[1], [0], [0], [1], [0, 0, 1, 1], [], []>} : vector<8x32xbf16>, vector<32x32xbf16>, vector<8x32xf32> -> vector<8x32xf32>
    %c0_11 = arith.constant 0 : index
    %c0_12 = arith.constant 0 : index
    %14 = vector.load %arg8[%c0_11, %c0_12] : memref<1x32xf32, #tpu.memory_space<vmem>>, vector<1x32xf32>
    %15 = vector.broadcast %14 : vector<1x32xf32> to vector<8x32xf32>
    %16 = arith.addf %13, %15 : vector<8x32xf32>
    %cst_13 = arith.constant 0.000000e+00 : f32
    %17 = vector.broadcast %cst_13 : f32 to vector<8x32xf32>
    %18 = arith.maximumf %16, %17 : vector<8x32xf32>
    %c0_14 = arith.constant 0 : index
    %c0_15 = arith.constant 0 : index
    %19 = vector.load %arg3[%c0_14, %c0_15] : memref<8x32xf32, #tpu.memory_space<vmem>>, vector<8x32xf32>
    %20 = arith.mulf %18, %19 : vector<8x32xf32>
    %21 = arith.truncf %20 : vector<8x32xf32> to vector<8x32xbf16>
    %c0_16 = arith.constant 0 : index
    %c0_17 = arith.constant 0 : index
    %22 = vector.load %arg9[%c0_16, %c0_17] : memref<32x32xbf16, #tpu.memory_space<vmem>>, vector<32x32xbf16>
    %cst_18 = arith.constant dense<0.000000e+00> : vector<8x32xf32>
    %23 = tpu.matmul %21, %22, %cst_18 {dimension_numbers = #tpu.dot_dimension_numbers<[1], [0], [0], [1], [0, 0, 1, 1], [], []>} : vector<8x32xbf16>, vector<32x32xbf16>, vector<8x32xf32> -> vector<8x32xf32>
    %c0_19 = arith.constant 0 : index
    %c0_20 = arith.constant 0 : index
    %24 = vector.load %arg10[%c0_19, %c0_20] : memref<1x32xf32, #tpu.memory_space<vmem>>, vector<1x32xf32>
    %25 = vector.broadcast %24 : vector<1x32xf32> to vector<8x32xf32>
    %26 = arith.addf %23, %25 : vector<8x32xf32>
    %cst_21 = arith.constant 0.000000e+00 : f32
    %27 = vector.broadcast %cst_21 : f32 to vector<8x32xf32>
    %28 = arith.maximumf %26, %27 : vector<8x32xf32>
    %29 = vector.extract_strided_slice %28 {offsets = [0, 0], sizes = [8, 16], strides = [1, 1]} : vector<8x32xf32> to vector<8x16xf32>
    %30 = vector.extract_strided_slice %28 {offsets = [0, 16], sizes = [8, 16], strides = [1, 1]} : vector<8x32xf32> to vector<8x16xf32>
    %c0_22 = arith.constant 0 : index
    %c0_23 = arith.constant 0 : index
    %31 = vector.load %arg4[%c0_22, %c0_23] : memref<8x16xf32, #tpu.memory_space<vmem>>, vector<8x16xf32>
    %cst_24 = arith.constant 5.000000e-01 : f32
    %32 = vector.broadcast %cst_24 : f32 to vector<8x16xf32>
    %33 = arith.mulf %30, %32 : vector<8x16xf32>
    %34 = math.exp %33 : vector<8x16xf32>
    %35 = arith.mulf %31, %34 : vector<8x16xf32>
    %36 = arith.addf %29, %35 : vector<8x16xf32>
    %37 = tpu.concatenate %36, %29, %30 in 1 : vector<8x16xf32>, vector<8x16xf32>, vector<8x16xf32> -> vector<8x48xf32>
    %c0_25 = arith.constant 0 : index
    %c0_26 = arith.constant 0 : index
    %38 = vector.load %arg11[%c0_25, %c0_26] : memref<8x48xf32, #tpu.memory_space<vmem>>, vector<8x48xf32>
    tpu.vector_store %arg11[%c0_25, %c0_26], %37 {strides = array<i32>} : memref<8x48xf32, #tpu.memory_space<vmem>>, vector<8x48xf32>,
    return
  }
  func.func @transform_0(%arg0: i32) -> (i32, i32) {
    %c0_i32 = arith.constant 0 : i32
    %c0_i32_0 = arith.constant 0 : i32
    return %arg0, %c0_i32 : i32, i32
  }
  func.func @transform_1(%arg0: i32) -> (i32, i32) {
    %c0_i32 = arith.constant 0 : i32
    %c0_i32_0 = arith.constant 0 : i32
    return %arg0, %c0_i32 : i32, i32
  }
  func.func @transform_2(%arg0: i32) -> (i32, i32) {
    %c0_i32 = arith.constant 0 : i32
    %c0_i32_0 = arith.constant 0 : i32
    return %arg0, %c0_i32 : i32, i32
  }
  func.func @transform_3(%arg0: i32) -> (i32, i32) {
    %c0_i32 = arith.constant 0 : i32
    %c0_i32_0 = arith.constant 0 : i32
    return %arg0, %c0_i32 : i32, i32
  }
  func.func @transform_4(%arg0: i32) -> (i32, i32) {
    %c0_i32 = arith.constant 0 : i32
    %c0_i32_0 = arith.constant 0 : i32
    %c0_i32_1 = arith.constant 0 : i32
    return %c0_i32, %c0_i32_0 : i32, i32
  }
  func.func @transform_5(%arg0: i32) -> (i32, i32) {
    %c0_i32 = arith.constant 0 : i32
    %c0_i32_0 = arith.constant 0 : i32
    %c0_i32_1 = arith.constant 0 : i32
    return %c0_i32, %c0_i32_0 : i32, i32
  }
  func.func @transform_6(%arg0: i32) -> (i32, i32) {
    %c0_i32 = arith.constant 0 : i32
    %c0_i32_0 = arith.constant 0 : i32
    %c0_i32_1 = arith.constant 0 : i32
    return %c0_i32, %c0_i32_0 : i32, i32
  }
  func.func @transform_7(%arg0: i32) -> (i32, i32) {
    %c0_i32 = arith.constant 0 : i32
    %c0_i32_0 = arith.constant 0 : i32
    %c0_i32_1 = arith.constant 0 : i32
    return %c0_i32, %c0_i32_0 : i32, i32
  }
  func.func @transform_8(%arg0: i32) -> (i32, i32) {
    %c0_i32 = arith.constant 0 : i32
    %c0_i32_0 = arith.constant 0 : i32
    %c0_i32_1 = arith.constant 0 : i32
    return %c0_i32, %c0_i32_0 : i32, i32
  }
  func.func @transform_9(%arg0: i32) -> (i32, i32) {
    %c0_i32 = arith.constant 0 : i32
    %c0_i32_0 = arith.constant 0 : i32
    %c0_i32_1 = arith.constant 0 : i32
    return %c0_i32, %c0_i32_0 : i32, i32
  }
  func.func @transform_10(%arg0: i32) -> (i32, i32) {
    %c0_i32 = arith.constant 0 : i32
    %c0_i32_0 = arith.constant 0 : i32
    return %arg0, %c0_i32 : i32, i32
  }
}

</mosaic_0001>

<llo_original>
// kernel: tpu_custom_call.1
$region0: #{tpu_custom_call.1}
  #allocation0 [shape = 'u32[]', space=smem, size = 0x4, offset = 0x4, fixed_abs, tag = 'smem constant byte address 0x4 - core index']
  #allocation1 [shape = 'u32[144,128]{1,0:T(1,128)}', space=vmem, size = 0x12000, scoped, tag = 'internal scratch']
  %s0 = inlined_call_operand.hbm [shape: f32[8,32], index: 0, kind: input, shape index: {}]
  %s1 = inlined_call_operand.hbm [shape: f32[8,32], index: 1, kind: input, shape index: {}]
  %s2 = inlined_call_operand.hbm [shape: f32[8,32], index: 2, kind: input, shape index: {}]
  %s3 = inlined_call_operand.hbm [shape: f32[8,16], index: 3, kind: input, shape index: {}]
  %s4 = inlined_call_operand.hbm [shape: bf16[32,32], index: 4, kind: input, shape index: {}]
  %s5 = inlined_call_operand.vmem [shape: f32[1,32], index: 5, kind: input, shape index: {}]
  %s6 = inlined_call_operand.hbm [shape: bf16[32,32], index: 6, kind: input, shape index: {}]
  %s7 = inlined_call_operand.vmem [shape: f32[1,32], index: 7, kind: input, shape index: {}]
  %s8 = inlined_call_operand.hbm [shape: bf16[32,32], index: 8, kind: input, shape index: {}]
  %s9 = inlined_call_operand.vmem [shape: f32[1,32], index: 9, kind: input, shape index: {}]
  %s10 = inlined_call_operand.hbm [shape: f32[8,48], index: 10, kind: output, shape index: {}]
  %s11 = sld [smem:[#allocation0]]
  $region78: #{tpu_custom_call.1} parent=0
    _
  %s13 = ssub.s32 1, %s11
  %s14 = scalar_select 0, %s13, %s11
  $region1: #{tpu_custom_call.1} parent=0
    #allocation2 [shape = 'u8[4096]{0}', space=vmem, size = 0x1000, scoped, tag = 'input window, operand 0, single buffered']
    #allocation3 [shape = 's32[1]{0}', space=sflag, size = 0x4, scoped, tag = 'scoped memory for tpu_custom_call.1']
    #allocation4 [shape = 's32[1]{0}', space=sflag, size = 0x4, scoped, tag = 'scoped memory for tpu_custom_call.1']
    #allocation5 [shape = 'u8[4096]{0}', space=vmem, size = 0x1000, scoped, tag = 'input window, operand 1, single buffered']
    #allocation6 [shape = 's32[1]{0}', space=sflag, size = 0x4, scoped, tag = 'scoped memory for tpu_custom_call.1']
    #allocation7 [shape = 'u8[4096]{0}', space=vmem, size = 0x1000, scoped, tag = 'input window, operand 2, single buffered']
    #allocation8 [shape = 'u8[4096]{0}', space=vmem, size = 0x1000, scoped, tag = 'input window, operand 3, single buffered']
    #allocation9 [shape = 's32[1]{0}', space=sflag, size = 0x4, scoped, tag = 'scoped memory for tpu_custom_call.1']
    #allocation10 [shape = 'u8[8192]{0}', space=vmem, size = 0x2000, scoped, tag = 'input window, operand 4, single buffered']
    #allocation11 [shape = 'u8[8192]{0}', space=vmem, size = 0x2000, scoped, tag = 'input window, operand 6, single buffered']
    #allocation12 [shape = 's32[1]{0}', space=sflag, size = 0x4, scoped, tag = 'scoped memory for tpu_custom_call.1']
    #allocation13 [shape = 'u8[8192]{0}', space=vmem, size = 0x2000, scoped, tag = 'input window, operand 8, single buffered']
    #allocation14 [shape = 'u8[4096]{0}', space=vmem, size = 0x1000, scoped, tag = 'output window, operand 0, single buffered']
    %15 = vsyncpa [#allocation3], 0
    %16 = vsyncpa [#allocation6], 0
    %17 = vsyncpa [#allocation9], 0
    %18 = vsyncpa [#allocation12], 0
    %19 = vsyncpa [#allocation4], 0
    // Predicated region
    $region2: #{tpu_custom_call.1} parent=1 // pred_check
      _
    $region3: #{tpu_custom_call.1} parent=1 // pred_check_branch
      %21 = sbr.rel (0) target = $region5
    $region4: #{tpu_custom_call.1} parent=1 // pred_region
      %s23 = ssub.s32 128, 128
      %24 = vsyncadd [#allocation3], %s23
      %s26 = sshll.u32 [#allocation2], 4
      %s27 = int_to_ptr.vmem [resolvable:$true] %s26
      %29 = dma.hbm_to_vmem [thread:$0]  %s0, 128, %s27, [#allocation3]
    $region5: #{tpu_custom_call.1} parent=1 // pred_fallthru
      _
    // Predicated region
    $region6: #{tpu_custom_call.1} parent=1 // pred_check
      _
    $region7: #{tpu_custom_call.1} parent=1 // pred_check_branch
      %31 = sbr.rel (0) target = $region9
    $region8: #{tpu_custom_call.1} parent=1 // pred_region
      %s33 = ssub.s32 128, 128
      %34 = vsyncadd [#allocation6], %s33
      %s36 = sshll.u32 [#allocation5], 4
      %s37 = int_to_ptr.vmem [resolvable:$true] %s36
      %39 = dma.hbm_to_vmem [thread:$0]  %s1, 128, %s37, [#allocation6]
    $region9: #{tpu_custom_call.1} parent=1 // pred_fallthru
      _
    // Predicated region
    $region10: #{tpu_custom_call.1} parent=1 // pred_check
      _
    $region11: #{tpu_custom_call.1} parent=1 // pred_check_branch
      %41 = sbr.rel (0) target = $region13
    $region12: #{tpu_custom_call.1} parent=1 // pred_region
      %s43 = ssub.s32 128, 128
      %44 = vsyncadd [#allocation6], %s43
      %s46 = sshll.u32 [#allocation7], 4
      %s47 = int_to_ptr.vmem [resolvable:$true] %s46
      %49 = dma.hbm_to_vmem [thread:$0]  %s2, 128, %s47, [#allocation6]
    $region13: #{tpu_custom_call.1} parent=1 // pred_fallthru
      _
    // Predicated region
    $region14: #{tpu_custom_call.1} parent=1 // pred_check
      _
    $region15: #{tpu_custom_call.1} parent=1 // pred_check_branch
      %51 = sbr.rel (0) target = $region17
    $region16: #{tpu_custom_call.1} parent=1 // pred_region
      %s53 = ssub.s32 128, 128
      %54 = vsyncadd [#allocation9], %s53
      %s56 = sshll.u32 [#allocation8], 4
      %s57 = int_to_ptr.vmem [resolvable:$true] %s56
      %59 = dma.hbm_to_vmem [thread:$0]  %s3, 128, %s57, [#allocation9]
    $region17: #{tpu_custom_call.1} parent=1 // pred_fallthru
      _
    // Predicated region
    $region18: #{tpu_custom_call.1} parent=1 // pred_check
      _
    $region19: #{tpu_custom_call.1} parent=1 // pred_check_branch
      %61 = sbr.rel (0) target = $region21
    $region20: #{tpu_custom_call.1} parent=1 // pred_region
      %s63 = ssub.s32 256, 256
      %64 = vsyncadd [#allocation9], %s63
      %s65 = sshll.u32 [#allocation10], 4
      %s66 = int_to_ptr.vmem [resolvable:$true] %s65
      %71 = dma.hbm_to_vmem [thread:$0]  %s4, 256, %s66, [#allocation9], 64, 64, 4
    $region21: #{tpu_custom_call.1} parent=1 // pred_fallthru
      _
    // Predicated region
    $region22: #{tpu_custom_call.1} parent=1 // pred_check
      _
    $region23: #{tpu_custom_call.1} parent=1 // pred_check_branch
      %73 = sbr.rel (0) target = $region25
    $region24: #{tpu_custom_call.1} parent=1 // pred_region
      _
    $region25: #{tpu_custom_call.1} parent=1 // pred_fallthru
      _
    // Predicated region
    $region26: #{tpu_custom_call.1} parent=1 // pred_check
      _
    $region27: #{tpu_custom_call.1} parent=1 // pred_check_branch
      %75 = sbr.rel (0) target = $region29
    $region28: #{tpu_custom_call.1} parent=1 // pred_region
      %s77 = ssub.s32 256, 256
      %78 = vsyncadd [#allocation12], %s77
      %s79 = sshll.u32 [#allocation11], 4
      %s80 = int_to_ptr.vmem [resolvable:$true] %s79
      %85 = dma.hbm_to_vmem [thread:$0]  %s6, 256, %s80, [#allocation12], 64, 64, 4
    $region29: #{tpu_custom_call.1} parent=1 // pred_fallthru
      _
    // Predicated region
    $region30: #{tpu_custom_call.1} parent=1 // pred_check
      _
    $region31: #{tpu_custom_call.1} parent=1 // pred_check_branch
      %87 = sbr.rel (0) target = $region33
    $region32: #{tpu_custom_call.1} parent=1 // pred_region
      _
    $region33: #{tpu_custom_call.1} parent=1 // pred_fallthru
      _
    // Predicated region
    $region34: #{tpu_custom_call.1} parent=1 // pred_check
      _
    $region35: #{tpu_custom_call.1} parent=1 // pred_check_branch
      %89 = sbr.rel (0) target = $region37
    $region36: #{tpu_custom_call.1} parent=1 // pred_region
      %s91 = ssub.s32 256, 256
      %92 = vsyncadd [#allocation12], %s91
      %s93 = sshll.u32 [#allocation13], 4
      %s94 = int_to_ptr.vmem [resolvable:$true] %s93
      %99 = dma.hbm_to_vmem [thread:$0]  %s8, 256, %s94, [#allocation12], 64, 64, 4
    $region37: #{tpu_custom_call.1} parent=1 // pred_fallthru
      _
    // Predicated region
    $region38: #{tpu_custom_call.1} parent=1 // pred_check
      _
    $region39: #{tpu_custom_call.1} parent=1 // pred_check_branch
      %101 = sbr.rel (0) target = $region41
    $region40: #{tpu_custom_call.1} parent=1 // pred_region
      _
    $region41: #{tpu_custom_call.1} parent=1 // pred_fallthru
      _
    // Predicated region
    $region42: #{tpu_custom_call.1} parent=1 // pred_check
      _
    $region43: #{tpu_custom_call.1} parent=1 // pred_check_branch
      %103 = sbr.rel (0) target = $region45
    $region44: #{tpu_custom_call.1} parent=1 // pred_region
      %104 = dma.done [#allocation3], 128
    $region45: #{tpu_custom_call.1} parent=1 // pred_fallthru
      _
    // Predicated region
    $region46: #{tpu_custom_call.1} parent=1 // pred_check
      _
    $region47: #{tpu_custom_call.1} parent=1 // pred_check_branch
      %106 = sbr.rel (0) target = $region49
    $region48: #{tpu_custom_call.1} parent=1 // pred_region
      %107 = dma.done [#allocation6], 128
    $region49: #{tpu_custom_call.1} parent=1 // pred_fallthru
      _
    // Predicated region
    $region50: #{tpu_custom_call.1} parent=1 // pred_check
      _
    $region51: #{tpu_custom_call.1} parent=1 // pred_check_branch
      %109 = sbr.rel (0) target = $region53
    $region52: #{tpu_custom_call.1} parent=1 // pred_region
      %110 = dma.done [#allocation6], 128
    $region53: #{tpu_custom_call.1} parent=1 // pred_fallthru
      _
    // Predicated region
    $region54: #{tpu_custom_call.1} parent=1 // pred_check
      _
    $region55: #{tpu_custom_call.1} parent=1 // pred_check_branch
      %112 = sbr.rel (0) target = $region57
    $region56: #{tpu_custom_call.1} parent=1 // pred_region
      %113 = dma.done [#allocation9], 128
    $region57: #{tpu_custom_call.1} parent=1 // pred_fallthru
      _
    // Predicated region
    $region58: #{tpu_custom_call.1} parent=1 // pred_check
      _
    $region59: #{tpu_custom_call.1} parent=1 // pred_check_branch
      %115 = sbr.rel (0) target = $region61
    $region60: #{tpu_custom_call.1} parent=1 // pred_region
      %116 = dma.done [#allocation9], 256
    $region61: #{tpu_custom_call.1} parent=1 // pred_fallthru
      _
    // Predicated region
    $region62: #{tpu_custom_call.1} parent=1 // pred_check
      _
    $region63: #{tpu_custom_call.1} parent=1 // pred_check_branch
      %118 = sbr.rel (0) target = $region65
    $region64: #{tpu_custom_call.1} parent=1 // pred_region
      %119 = dma.done [#allocation12], 256
    $region65: #{tpu_custom_call.1} parent=1 // pred_fallthru
      _
    // Predicated region
    $region66: #{tpu_custom_call.1} parent=1 // pred_check
      _
    $region67: #{tpu_custom_call.1} parent=1 // pred_check_branch
      %121 = sbr.rel (0) target = $region69
    $region68: #{tpu_custom_call.1} parent=1 // pred_region
      %122 = dma.done [#allocation12], 256
    $region69: #{tpu_custom_call.1} parent=1 // pred_fallthru
      _
    %v124 = vld [vmem:[#allocation2] sm:$0xff]
    %v125 = vpack.c.bf16 %v124, %v124
    %v126 = vld [vmem:[#allocation10] sm:$0xf]
    %v127 = vld [vmem:[#allocation10 + $0x4] sm:$0xf]
    %v128 = vld [vmem:[#allocation10 + $0x8] sm:$0xf]
    %v129 = vld [vmem:[#allocation10 + $0xc] sm:$0xf]
    %v130 = vld [vmem:[%s5] sm:$0x1]
    %v132 = vlaneseq
    %v133 = vshrl.u32 %v132, 7
    %v134 = vsub.s32 0, %v133
    %v135 = vrot.slane %v130, %v134
    %v141 = vunpack.c.l.b16 %v126
    %v142 = vunpack.c.l.b16 %v127
    %v143 = vunpack.c.l.b16 %v128
    %v144 = vunpack.c.l.b16 %v129
    %v145 = vpack.c.b16 %v142, %v141
    %v146 = vpack.c.b16 %v144, %v143
    %vm149 = vcmask 261120
    %v151 = vsel %vm149, %v125, 0
    %153 = vmatprep.subr.bf16.mxu0 0
    %154 = vmatpush1.bf16.msra.mxu0 0
    %155 = vmatprep.subr.bf16.mxu0 0
    %156 = vmatpush1.bf16.msra.mxu0 0
    %157 = vmatprep.subr.bf16.mxu0 0
    %158 = vmatpush1.bf16.msra.mxu0 0
    %159 = vmatprep.subr.bf16.mxu0 0
    %160 = vmatpush1.bf16.msra.mxu0 0
    %161 = vmatprep.subr.bf16.mxu0 0
    %162 = vmatpush1.bf16.msra.mxu0 0
    %163 = vmatprep.subr.bf16.mxu0 0
    %164 = vmatpush1.bf16.msra.mxu0 0
    %165 = vmatprep.subr.bf16.mxu0 0
    %166 = vmatpush1.bf16.msra.mxu0 %v146
    %167 = vmatprep.subr.bf16.mxu0 0
    %168 = vmatpush1.bf16.msra.mxu0 %v145
    %169 = vmatprep.subr.bf16.mxu0 0
    %170 = vmatpush2.bf16.msra.mxu0 0
    %171 = vmatprep.subr.bf16.mxu0 0
    %172 = vmatpush2.bf16.msra.mxu0 0
    %173 = vmatprep.subr.bf16.mxu0 0
    %174 = vmatpush2.bf16.msra.mxu0 0
    %175 = vmatprep.subr.bf16.mxu0 0
    %176 = vmatpush2.bf16.msra.mxu0 0
    %177 = vmatprep.subr.bf16.mxu0 0
    %178 = vmatpush2.bf16.msra.mxu0 0
    %179 = vmatprep.subr.bf16.mxu0 0
    %180 = vmatpush2.bf16.msra.mxu0 0
    %181 = vmatprep.subr.bf16.mxu0 0
    %182 = vmatpush2.bf16.msra.mxu0 0
    %183 = vmatprep.subr.bf16.mxu0 0
    %184 = vmatpush2.bf16.msra.mxu0 0
    %185 = vmatprep.mubr.bf16.mxu0 0
    %186 = vmatmul.mubr.bf16.gmra.mxu0 %v151
    %v187 = vpop.f32.mrf.mxu0
    %v188 = vadd.f32 %v135, %v187
    %v189 = vpop.f32.mrf.mxu0
    %v190 = vpop.f32.mrf.mxu0
    %v191 = vpop.f32.mrf.mxu0
    %192 = vdwg.mxu0
    %v193 = vmax.f32 %v188, 0.0
    %v194 = vld [vmem:[#allocation5] sm:$0xff]
    %v195 = vmul.f32 %v193, %v194
    %v196 = vpack.c.bf16 %v195, %v195
    %v197 = vld [vmem:[#allocation11] sm:$0xf]
    %v198 = vld [vmem:[#allocation11 + $0x4] sm:$0xf]
    %v199 = vld [vmem:[#allocation11 + $0x8] sm:$0xf]
    %v200 = vld [vmem:[#allocation11 + $0xc] sm:$0xf]
    %v201 = vld [vmem:[%s7] sm:$0x1]
    %v203 = vlaneseq
    %v204 = vshrl.u32 %v203, 7
    %v205 = vsub.s32 0, %v204
    %v206 = vrot.slane %v201, %v205
    %v212 = vunpack.c.l.b16 %v197
    %v213 = vunpack.c.l.b16 %v198
    %v214 = vunpack.c.l.b16 %v199
    %v215 = vunpack.c.l.b16 %v200
    %v216 = vpack.c.b16 %v213, %v212
    %v217 = vpack.c.b16 %v215, %v214
    %v221 = vsel %vm149, %v196, 0
    %223 = vmatprep.subr.bf16.mxu0 0
    %224 = vmatpush1.bf16.msra.mxu0 0
    %225 = vmatprep.subr.bf16.mxu0 0
    %226 = vmatpush1.bf16.msra.mxu0 0
    %227 = vmatprep.subr.bf16.mxu0 0
    %228 = vmatpush1.bf16.msra.mxu0 0
    %229 = vmatprep.subr.bf16.mxu0 0
    %230 = vmatpush1.bf16.msra.mxu0 0
    %231 = vmatprep.subr.bf16.mxu0 0
    %232 = vmatpush1.bf16.msra.mxu0 0
    %233 = vmatprep.subr.bf16.mxu0 0
    %234 = vmatpush1.bf16.msra.mxu0 0
    %235 = vmatprep.subr.bf16.mxu0 0
    %236 = vmatpush1.bf16.msra.mxu0 %v217
    %237 = vmatprep.subr.bf16.mxu0 0
    %238 = vmatpush1.bf16.msra.mxu0 %v216
    %239 = vmatprep.subr.bf16.mxu0 0
    %240 = vmatpush2.bf16.msra.mxu0 0
    %241 = vmatprep.subr.bf16.mxu0 0
    %242 = vmatpush2.bf16.msra.mxu0 0
    %243 = vmatprep.subr.bf16.mxu0 0
    %244 = vmatpush2.bf16.msra.mxu0 0
    %245 = vmatprep.subr.bf16.mxu0 0
    %246 = vmatpush2.bf16.msra.mxu0 0
    %247 = vmatprep.subr.bf16.mxu0 0
    %248 = vmatpush2.bf16.msra.mxu0 0
    %249 = vmatprep.subr.bf16.mxu0 0
    %250 = vmatpush2.bf16.msra.mxu0 0
    %251 = vmatprep.subr.bf16.mxu0 0
    %252 = vmatpush2.bf16.msra.mxu0 0
    %253 = vmatprep.subr.bf16.mxu0 0
    %254 = vmatpush2.bf16.msra.mxu0 0
    %255 = vmatprep.mubr.bf16.mxu0 0
    %256 = vmatmul.mubr.bf16.gmra.mxu0 %v221
    %v257 = vpop.f32.mrf.mxu0
    %v258 = vadd.f32 %v206, %v257
    %v259 = vpop.f32.mrf.mxu0
    %v260 = vpop.f32.mrf.mxu0
    %v261 = vpop.f32.mrf.mxu0
    %262 = vdwg.mxu0
    %v263 = vmax.f32 %v258, 0.0
    %v264 = vld [vmem:[#allocation7] sm:$0xff]
    %v265 = vmul.f32 %v263, %v264
    %v266 = vpack.c.bf16 %v265, %v265
    %v267 = vld [vmem:[#allocation13] sm:$0xf]
    %v268 = vld [vmem:[#allocation13 + $0x4] sm:$0xf]
    %v269 = vld [vmem:[#allocation13 + $0x8] sm:$0xf]
    %v270 = vld [vmem:[#allocation13 + $0xc] sm:$0xf]
    %v271 = vld [vmem:[%s9] sm:$0x1]
    %v273 = vlaneseq
    %v274 = vshrl.u32 %v273, 7
    %v275 = vsub.s32 0, %v274
    %v276 = vrot.slane %v271, %v275
    %v282 = vunpack.c.l.b16 %v267
    %v283 = vunpack.c.l.b16 %v268
    %v284 = vunpack.c.l.b16 %v269
    %v285 = vunpack.c.l.b16 %v270
    %v286 = vpack.c.b16 %v283, %v282
    %v287 = vpack.c.b16 %v285, %v284
    %v291 = vsel %vm149, %v266, 0
    %293 = vmatprep.subr.bf16.mxu0 0
    %294 = vmatpush1.bf16.msra.mxu0 0
    %295 = vmatprep.subr.bf16.mxu0 0
    %296 = vmatpush1.bf16.msra.mxu0 0
    %297 = vmatprep.subr.bf16.mxu0 0
    %298 = vmatpush1.bf16.msra.mxu0 0
    %299 = vmatprep.subr.bf16.mxu0 0
    %300 = vmatpush1.bf16.msra.mxu0 0
    %301 = vmatprep.subr.bf16.mxu0 0
    %302 = vmatpush1.bf16.msra.mxu0 0
    %303 = vmatprep.subr.bf16.mxu0 0
    %304 = vmatpush1.bf16.msra.mxu0 0
    %305 = vmatprep.subr.bf16.mxu0 0
    %306 = vmatpush1.bf16.msra.mxu0 %v287
    %307 = vmatprep.subr.bf16.mxu0 0
    %308 = vmatpush1.bf16.msra.mxu0 %v286
    %309 = vmatprep.subr.bf16.mxu0 0
    %310 = vmatpush2.bf16.msra.mxu0 0
    %311 = vmatprep.subr.bf16.mxu0 0
    %312 = vmatpush2.bf16.msra.mxu0 0
    %313 = vmatprep.subr.bf16.mxu0 0
    %314 = vmatpush2.bf16.msra.mxu0 0
    %315 = vmatprep.subr.bf16.mxu0 0
    %316 = vmatpush2.bf16.msra.mxu0 0
    %317 = vmatprep.subr.bf16.mxu0 0
    %318 = vmatpush2.bf16.msra.mxu0 0
    %319 = vmatprep.subr.bf16.mxu0 0
    %320 = vmatpush2.bf16.msra.mxu0 0
    %321 = vmatprep.subr.bf16.mxu0 0
    %322 = vmatpush2.bf16.msra.mxu0 0
    %323 = vmatprep.subr.bf16.mxu0 0
    %324 = vmatpush2.bf16.msra.mxu0 0
    %325 = vmatprep.mubr.bf16.mxu0 0
    %326 = vmatmul.mubr.bf16.gmra.mxu0 %v291
    %v327 = vpop.f32.mrf.mxu0
    %v328 = vadd.f32 %v276, %v327
    %v329 = vpop.f32.mrf.mxu0
    %v330 = vpop.f32.mrf.mxu0
    %v331 = vpop.f32.mrf.mxu0
    %332 = vdwg.mxu0
    %v333 = vmax.f32 %v328, 0.0
    %v334 = vld [vmem:[#allocation8] sm:$0xff]
    %v335 = vmul.f32 %v333, 0.5
    %v336 = vmul.f32 %v335, 1.442695
    %v337 = vpow.pop %v336
    %339 = vrot.lane.b32.xlu0 %v337, 112
    %v340 = vpop.permute.xlu0 %339
    %v342 = vmul.f32 %v334, %v340
    %v343 = vadd.f32 %v333, %v342
    %345 = vrot.lane.b32.xlu0 %v333, 16
    %v346 = vpop.permute.xlu0 %345
    %vm348 = vcmask 130048
    %v349 = vsel %vm348, %v343, %v346
    %v350 = vsel %vm149, %v349, %v346
    %vm351 = vcmask 392192
    %352 = vst.msk [vmem:[#allocation14] sm:$0xff] %vm351, %v350
    // Predicated region
    $region70: #{tpu_custom_call.1} parent=1 // pred_check
      _
    $region71: #{tpu_custom_call.1} parent=1 // pred_check_branch
      %354 = sbr.rel (0) target = $region73
    $region72: #{tpu_custom_call.1} parent=1 // pred_region
      %s356 = ssub.s32 128, 128
      %357 = vsyncadd [#allocation4], %s356
      %s359 = sshll.u32 [#allocation14], 4
      %s360 = int_to_ptr.vmem [resolvable:$true] %s359
      %362 = dma.vmem_to_hbm [thread:$0]  %s360, 128, %s10, [#allocation4]
    $region73: #{tpu_custom_call.1} parent=1 // pred_fallthru
      _
    // Predicated region
    $region74: #{tpu_custom_call.1} parent=1 // pred_check
      _
    $region75: #{tpu_custom_call.1} parent=1 // pred_check_branch
      %364 = sbr.rel (0) target = $region77
    $region76: #{tpu_custom_call.1} parent=1 // pred_region
      %365 = dma.done [#allocation4], 128
    $region77: #{tpu_custom_call.1} parent=1 // pred_fallthru
      _
    %366 = vsyncpa [#allocation3], 1
    %367 = vsyncpa [#allocation6], 1
    %368 = vsyncpa [#allocation9], 1
    %369 = vsyncpa [#allocation12], 1
    %370 = vsyncpa [#allocation4], 1

</llo_original>
